<compile_context>
chip_gen: v5e
topology: v5e:2x2
jax: 0.10.0
libtpu: 0.0.40
codegen_flags: <defaults>
</compile_context>

<pallas_src>
import functools

import jax
import jax.numpy as jnp
from jax import lax
from jax.experimental import pallas as pl
from jax.experimental.pallas import tpu as pltpu

_LANE = 128
_MAX_TD = 2048          # max lane-tile width (f32: 8 KiB per sublane row)


def _cdiv(a, b):
    return -(-a // b)


def _round_up(x, m):
    return _cdiv(x, m) * m


def _device_caps():
    """(row_block_cap, vmem_limit_bytes) tuned per TPU generation."""
    try:
        kind = jax.devices()[0].device_kind.lower()
    except Exception:
        kind = ""
    if "v5" in kind or "v6" in kind:
        # 128 MiB physical VMEM: bigger row blocks amortize the ~0.35 us/step
        # grid overhead; raise the scoped-VMEM limit to match.
        return 1024, 64 * 1024 * 1024
    if "v2" in kind or "v3" in kind:
        return 256, 12 * 1024 * 1024
    # v7x (64 MiB physical VMEM) and unknown devices: stay conservative.
    return 512, 40 * 1024 * 1024


def _pick_row_split(n, d):
    """Pick r | d for the (N, D) -> (N*r, D/r) repack.

    Preferences (lexicographic): rows fill whole 8-sublane vregs; the whole
    feature slice fits one lane tile (no lane-axis reduction grid);
    rows >= 16 so there are >= 2 row blocks (both v7x TensorCores get work);
    rows as large as possible (up to 1024) so row blocks are big.
    """
    best_r, best_score = 1, None
    for r in range(1, min(d, 1024) + 1):
        if d % r:
            continue
        rows, dr = n * r, d // r
        if r > 1 and dr < _LANE:
            continue
        score = (rows % 8 == 0, dr <= _MAX_TD, rows >= 16,
                 min(rows, 1024), -r)
        if best_score is None or score > best_score:
            best_r, best_score = r, score
    return best_r


def _pick_row_block(rows, cap):
    """Row-block size: multiple of 8, <= cap, aiming for >= 2 row blocks."""
    if rows <= 8:
        return rows                      # single (full-dim) block
    return min(cap, _round_up(_cdiv(rows, 2), 8))


def _dice_kernel(pred_ref, gt_ref, inter_ref, union_ref, *,
                 apply_sigmoid, grid_k, td, tail_valid):
    k = pl.program_id(1)

    @pl.when(k == 0)
    def _():
        inter_ref[...] = jnp.zeros_like(inter_ref)
        union_ref[...] = jnp.zeros_like(union_ref)

    p = pred_ref[...].astype(jnp.float32)
    g = gt_ref[...].astype(jnp.float32)

    if apply_sigmoid:
        # exp(-x) runs on the EUP slot, keeping VALU (the first slot to
        # saturate at HBM stream rate) nearly free.  approx=True on the
        # reciprocal risks missing the 1e-5 test tolerance, so keep it exact.
        p = pl.reciprocal(1.0 + jnp.exp(-p), approx=False)

    def _accum(p_v, g_v):
        # Per-row partial reductions for this lane tile; union fused into one.
        inter_ref[...] += jnp.sum(p_v * g_v, axis=1, keepdims=True)
        union_ref[...] += jnp.sum(p_v + g_v, axis=1, keepdims=True)

    if tail_valid == td:
        _accum(p, g)                     # lane dim divides evenly: no masking
    else:
        # Mask only the final lane tile: its OOB lanes hold garbage (and
        # sigmoid(garbage) != 0), so zero BOTH p and g there.  Steady-state
        # tiles stay mask-free.
        @pl.when(k < grid_k - 1)
        def _():
            _accum(p, g)

        @pl.when(k == grid_k - 1)
        def _():
            lane = lax.broadcasted_iota(jnp.int32, p.shape, 1)
            valid = lane < tail_valid
            _accum(jnp.where(valid, p, 0.0), jnp.where(valid, g, 0.0))


def dice_coeff(pred, gt, smooth=1e-05, activation='sigmoid'):
    """JAX/Pallas equivalent of diceCoeff.forward(pred, gt, smooth, activation)."""
    if activation is None or activation == 'none':
        apply_sigmoid = False
    elif activation == 'sigmoid':
        apply_sigmoid = True
    elif activation == 'softmax2d':
        # TODO(synk): fuse the channel softmax into the kernel ((N, C, HW)
        # blocking with full C resident and an in-kernel reduce over C) to
        # save the extra full HBM round trip of pred on this path.
        pred = jax.nn.softmax(pred, axis=1)
        apply_sigmoid = False
    else:
        raise NotImplementedError(
            'Activation implemented for sigmoid and softmax2d')

    n = gt.shape[0]
    d = 1
    for s in gt.shape[1:]:
        d *= s

    row_cap, vmem_limit = _device_caps()

    # Repack (N, D) -> (N*R, D/R): fills sublanes for small N and gives big
    # row blocks so the grid streams few, large tiles.
    r = _pick_row_split(n, d)
    rows = n * r
    dr = d // r

    # Reshape only (bitcast-level in XLA) -- no wrapper pad / cast, inputs
    # stream in their upstream dtype.
    pred_2d = pred.reshape(rows, dr)
    gt_2d = gt.reshape(rows, dr)

    if dr <= _MAX_TD:
        td, grid_k, tail_valid = dr, 1, dr          # full-width tile, no mask
    else:
        td = _MAX_TD
        grid_k = _cdiv(dr, td)
        tail_valid = dr - (grid_k - 1) * td         # masked tail tile only

    row_blk = _pick_row_block(rows, row_cap)
    grid = (_cdiv(rows, row_blk), grid_k)

    kernel = functools.partial(
        _dice_kernel,
        apply_sigmoid=apply_sigmoid,
        grid_k=grid_k,
        td=td,
        tail_valid=tail_valid,
    )

    in_bytes = (pred_2d.size * pred_2d.dtype.itemsize
                + gt_2d.size * gt_2d.dtype.itemsize)
    cost = pl.CostEstimate(
        flops=5 * rows * dr,
        transcendentals=rows * dr if apply_sigmoid else 0,
        bytes_accessed=in_bytes + rows * 2 * 4,
    )

    # TODO(synk): on v7x, add pipeline_mode=pl.Buffered(3) on the input specs
    # and CORE_PARALLEL row semantics once confirmed on the deployed Mosaic;
    # lane-wide scratch accumulators (reduce at k==last) are a further minor
    # win if VALU/XLU ever bind before HBM.
    inter_2d, union_2d = pl.pallas_call(
        kernel,
        out_shape=(jax.ShapeDtypeStruct((rows, 1), jnp.float32),
                   jax.ShapeDtypeStruct((rows, 1), jnp.float32)),
        grid_spec=pltpu.PrefetchScalarGridSpec(
            num_scalar_prefetch=0,
            grid=grid,
            in_specs=[
                pl.BlockSpec((row_blk, td), lambda i, k: (i, k)),
                pl.BlockSpec((row_blk, td), lambda i, k: (i, k)),
            ],
            out_specs=[
                pl.BlockSpec((row_blk, 1), lambda i, k: (i, 0)),
                pl.BlockSpec((row_blk, 1), lambda i, k: (i, 0)),
            ],
        ),
        compiler_params=pltpu.CompilerParams(
            dimension_semantics=("parallel", "arbitrary"),
            vmem_limit_bytes=vmem_limit,
        ),
        cost_estimate=cost,
    )(pred_2d, gt_2d)

    # Tiny finalize in plain JAX: fold the R row-splits back per batch element,
    # form the smoothed dice ratio, mean over batch.
    inter = jnp.sum(inter_2d.reshape(n, r), axis=1)
    union = jnp.sum(union_2d.reshape(n, r), axis=1)
    dice = (2.0 * inter + float(smooth)) / (union + float(smooth))
    return jnp.sum(dice) / n


def _reference(pred, gt, smooth=1e-05, activation='sigmoid'):
    """Pure-JAX reference mirroring the PyTorch forward."""
    if activation == 'sigmoid':
        pred = jax.nn.sigmoid(pred)
    elif activation == 'softmax2d':
        pred = jax.nn.softmax(pred, axis=1)
    n = gt.shape[0]
    pf = pred.reshape(n, -1).astype(jnp.float32)
    gf = gt.reshape(n, -1).astype(jnp.float32)
    inter = jnp.sum(pf * gf, axis=1)
    union = jnp.sum(pf, axis=1) + jnp.sum(gf, axis=1)
    loss = (2.0 * inter + smooth) / (union + smooth)
    return jnp.sum(loss) / n


if __name__ == "__main__":
    key = jax.random.PRNGKey(0)
    keys = jax.random.split(key, 8)

    # Case 1: standard segmentation logits/mask pair, sigmoid activation.
    N, C, H, W = 2, 4, 16, 16
    pred = jax.random.normal(keys[0], (N, C, H, W), dtype=jnp.float32)
    gt = (jax.random.uniform(keys[1], (N, C, H, W)) > 0.5).astype(jnp.float32)
    out = jax.block_until_ready(dice_coeff(pred, gt))
    ref = _reference(pred, gt)
    assert jnp.allclose(out, ref, rtol=1e-5, atol=1e-5), (out, ref)

    # Case 2: non-128-aligned flatten handled without any wrapper padding.
    pred2 = jax.random.normal(keys[2], (2, 3, 10, 10), dtype=jnp.float32)
    gt2 = (jax.random.uniform(keys[3], (2, 3, 10, 10)) > 0.5).astype(jnp.float32)
    out2 = jax.block_until_ready(dice_coeff(pred2, gt2))
    ref2 = _reference(pred2, gt2)
    assert jnp.allclose(out2, ref2, rtol=1e-5, atol=1e-5), (out2, ref2)

    # Case 3: softmax2d path (wrapper softmax, kernel with no activation).
    out3 = jax.block_until_ready(dice_coeff(pred, gt, activation='softmax2d'))
    ref3 = _reference(pred, gt, activation='softmax2d')
    assert jnp.allclose(out3, ref3, rtol=1e-5, atol=1e-5), (out3, ref3)

    # Case 4: odd batch / awkward D -> partial (clipped) tail row block.
    pred4 = jax.random.normal(keys[4], (3, 5, 37, 29), dtype=jnp.float32)
    gt4 = (jax.random.uniform(keys[5], (3, 5, 37, 29)) > 0.5).astype(jnp.float32)
    out4 = jax.block_until_ready(dice_coeff(pred4, gt4))
    ref4 = _reference(pred4, gt4)
    assert jnp.allclose(out4, ref4, rtol=1e-5, atol=1e-5), (out4, ref4)

    # Case 5: prime-sized D > 2048 -> multi-tile lane grid with a masked tail.
    pred5 = jax.random.normal(keys[6], (4, 1, 1, 4099), dtype=jnp.float32)
    gt5 = (jax.random.uniform(keys[7], (4, 1, 1, 4099)) > 0.5).astype(jnp.float32)
    out5 = jax.block_until_ready(dice_coeff(pred5, gt5))
    ref5 = _reference(pred5, gt5)
    assert jnp.allclose(out5, ref5, rtol=1e-5, atol=1e-5), (out5, ref5)

    print("KERNEL_OK")
</pallas_src>

<mosaic_0001>
module attributes {stable_mosaic.version = 11 : i64} {
  func.func @_dice_kernel(%arg0: i32, %arg1: i32, %arg2: memref<8x128xf32, #tpu.memory_space<vmem>>, %arg3: memref<8x128xf32, #tpu.memory_space<vmem>>, %arg4: memref<8x1xf32, #tpu.memory_space<vmem>>, %arg5: memref<8x1xf32, #tpu.memory_space<vmem>>) attributes {dimension_semantics = [#tpu.dimension_semantics<parallel>, #tpu.dimension_semantics<arbitrary>], iteration_bounds = array<i64: 2, 1>, scalar_prefetch = 0 : i64, scratch_operands = 0 : i64, tpu.core_type = #tpu.core_type<tc>, window_params = [{transform_indices = @transform_0, window_bounds = array<i64: 8, 128>}, {transform_indices = @transform_1, window_bounds = array<i64: 8, 128>}, {transform_indices = @transform_2, window_bounds = array<i64: 8, 1>}, {transform_indices = @transform_3, window_bounds = array<i64: 8, 1>}]} {
    %c0_i32 = arith.constant 0 : i32
    %0 = arith.cmpi eq, %arg1, %c0_i32 : i32
    %1 = arith.extui %0 : i1 to i32
    %c0_i32_0 = arith.constant 0 : i32
    %2 = arith.cmpi ne, %1, %c0_i32_0 : i32
    scf.if %2 {
      %cst_15 = arith.constant 0.000000e+00 : f32
      %23 = vector.broadcast %cst_15 : f32 to vector<8x1xf32>
      %c0_16 = arith.constant 0 : index
      %c0_17 = arith.constant 0 : index
      %24 = vector.load %arg4[%c0_16, %c0_17] : memref<8x1xf32, #tpu.memory_space<vmem>>, vector<8x1xf32>
      tpu.vector_store %arg4[%c0_16, %c0_17], %23 {strides = array<i32>} : memref<8x1xf32, #tpu.memory_space<vmem>>, vector<8x1xf32>,
      %cst_18 = arith.constant 0.000000e+00 : f32
      %25 = vector.broadcast %cst_18 : f32 to vector<8x1xf32>
      %c0_19 = arith.constant 0 : index
      %c0_20 = arith.constant 0 : index
      %26 = vector.load %arg5[%c0_19, %c0_20] : memref<8x1xf32, #tpu.memory_space<vmem>>, vector<8x1xf32>
      tpu.vector_store %arg5[%c0_19, %c0_20], %25 {strides = array<i32>} : memref<8x1xf32, #tpu.memory_space<vmem>>, vector<8x1xf32>,
    } else {
    }
    %c0 = arith.constant 0 : index
    %c0_1 = arith.constant 0 : index
    %3 = vector.load %arg2[%c0, %c0_1] : memref<8x128xf32, #tpu.memory_space<vmem>>, vector<8x128xf32>
    %c0_2 = arith.constant 0 : index
    %c0_3 = arith.constant 0 : index
    %4 = vector.load %arg3[%c0_2, %c0_3] : memref<8x128xf32, #tpu.memory_space<vmem>>, vector<8x128xf32>
    %cst = arith.constant 0.000000e+00 : f32
    %5 = vector.broadcast %cst : f32 to vector<8x128xf32>
    %6 = arith.subf %5, %3 : vector<8x128xf32>
    %7 = math.exp %6 : vector<8x128xf32>
    %cst_4 = arith.constant 1.000000e+00 : f32
    %8 = vector.broadcast %cst_4 : f32 to vector<8x128xf32>
    %9 = arith.addf %8, %7 : vector<8x128xf32>
    %10 = tpu.reciprocal %9 : vector<8x128xf32> -> vector<8x128xf32>
    %c0_5 = arith.constant 0 : index
    %c0_6 = arith.constant 0 : index
    %11 = vector.load %arg4[%c0_5, %c0_6] : memref<8x1xf32, #tpu.memory_space<vmem>>, vector<8x1xf32>
    %12 = arith.mulf %10, %4 : vector<8x128xf32>
    %cst_7 = arith.constant dense<0.000000e+00> : vector<8xf32>
    %13 = vector.multi_reduction <add>, %12, %cst_7 [1] : vector<8x128xf32> to vector<8xf32>
    %14 = vector.shape_cast %13 : vector<8xf32> to vector<8x1xf32>
    %15 = arith.addf %11, %14 : vector<8x1xf32>
    %c0_8 = arith.constant 0 : index
    %c0_9 = arith.constant 0 : index
    %16 = vector.load %arg4[%c0_8, %c0_9] : memref<8x1xf32, #tpu.memory_space<vmem>>, vector<8x1xf32>
    tpu.vector_store %arg4[%c0_8, %c0_9], %15 {strides = array<i32>} : memref<8x1xf32, #tpu.memory_space<vmem>>, vector<8x1xf32>,
    %c0_10 = arith.constant 0 : index
    %c0_11 = arith.constant 0 : index
    %17 = vector.load %arg5[%c0_10, %c0_11] : memref<8x1xf32, #tpu.memory_space<vmem>>, vector<8x1xf32>
    %18 = arith.addf %10, %4 : vector<8x128xf32>
    %cst_12 = arith.constant dense<0.000000e+00> : vector<8xf32>
    %19 = vector.multi_reduction <add>, %18, %cst_12 [1] : vector<8x128xf32> to vector<8xf32>
    %20 = vector.shape_cast %19 : vector<8xf32> to vector<8x1xf32>
    %21 = arith.addf %17, %20 : vector<8x1xf32>
    %c0_13 = arith.constant 0 : index
    %c0_14 = arith.constant 0 : index
    %22 = vector.load %arg5[%c0_13, %c0_14] : memref<8x1xf32, #tpu.memory_space<vmem>>, vector<8x1xf32>
    tpu.vector_store %arg5[%c0_13, %c0_14], %21 {strides = array<i32>} : memref<8x1xf32, #tpu.memory_space<vmem>>, vector<8x1xf32>,
    return
  }
  func.func @transform_0(%arg0: i32, %arg1: i32) -> (i32, i32) {
    %c0_i32 = arith.constant 0 : i32
    return %arg0, %arg1 : i32, i32
  }
  func.func @transform_1(%arg0: i32, %arg1: i32) -> (i32, i32) {
    %c0_i32 = arith.constant 0 : i32
    return %arg0, %arg1 : i32, i32
  }
  func.func @transform_2(%arg0: i32, %arg1: i32) -> (i32, i32) {
    %c0_i32 = arith.constant 0 : i32
    %c0_i32_0 = arith.constant 0 : i32
    return %arg0, %c0_i32 : i32, i32
  }
  func.func @transform_3(%arg0: i32, %arg1: i32) -> (i32, i32) {
    %c0_i32 = arith.constant 0 : i32
    %c0_i32_0 = arith.constant 0 : i32
    return %arg0, %c0_i32 : i32, i32
  }
}

</mosaic_0001>

<llo_original>
// kernel: tpu_custom_call.1
$region0: #{tpu_custom_call.1}
  #allocation0 [shape = 'u32[]', space=smem, size = 0x4, offset = 0x4, fixed_abs, tag = 'smem constant byte address 0x4 - core index']
  #allocation1 [shape = 'u32[72,128]{1,0:T(1,128)}', space=vmem, size = 0x9000, scoped, tag = 'internal scratch']
  %s0 = inlined_call_operand.hbm [shape: f32[16,128], index: 0, kind: input, shape index: {}]
  %s1 = inlined_call_operand.hbm [shape: f32[16,128], index: 1, kind: input, shape index: {}]
  %s2 = inlined_call_operand.vmem [shape: f32[16,1], index: 2, kind: output, shape index: {0}]
  %s3 = inlined_call_operand.vmem [shape: f32[16,1], index: 3, kind: output, shape index: {1}]
  %4 = xla_tuple %s2, %s3
  %s5 = sld [smem:[#allocation0]]
  $region61: #{tpu_custom_call.1} parent=0
    _
  %s7 = ssub.s32 1, %s5
  %s8 = scalar_select 0, %s7, %s5
  $region1: #{tpu_custom_call.1} parent=0
    #allocation2 [shape = 'u8[8192]{0}', space=vmem, size = 0x2000, scoped, tag = 'input window, operand 0']
    #allocation3 [shape = 's32[2]{0}', space=sflag, size = 0x8, scoped, tag = 'scoped memory for tpu_custom_call.1']
    #allocation4 [shape = 'u8[8192]{0}', space=vmem, size = 0x2000, scoped, tag = 'input window, operand 1']
    #allocation5 [shape = 's32[2]{0}', space=sflag, size = 0x8, scoped, tag = 'scoped memory for tpu_custom_call.1']
    %9 = vsyncpa [#allocation3], 0
    %s10 = scalar_lea.sflag [#allocation3], 1
    %11 = vsyncpa %s10, 0
    %12 = vsyncpa [#allocation5], 0
    %s13 = scalar_lea.sflag [#allocation5], 1
    %14 = vsyncpa %s13, 0
    loop: start=0, step=1, limit=4
    $region2: #{tpu_custom_call.1} parent=1 // loop_pre_header
      _
    $region3: #{tpu_custom_call.1} parent=1 // loop_header
      %s16 = sphi 0, %s20
      %p17 = scmp.ge.s32.totalorder %s16, 4
      %s23 = sphi 0, %s35
      %s24 = sphi 0, %s31
      %s25 = sphi 0, %s23
      %s26 = sphi 0, %s24
      %s27 = sphi 0, %s25
      %s28 = sphi 0, %s26
      %s40 = sphi 0, %s42
      %s43 = sphi 0, %s40
      %s44 = sphi 0, %s43
      %s60 = sphi 0, %s44
      %s68 = sphi 0, %s70
      %s71 = sphi 0, %s68
      %s72 = sphi 0, %s71
      %s88 = sphi 0, %s72
      %s94 = sphi 0, %s96
      %s97 = sphi 0, %s94
      %s98 = sphi 0, %s97
      %s114 = sphi 0, %s98
      %s120 = sphi 0, %s122
      %s123 = sphi 0, %s120
      %s124 = sphi 0, %s123
      %s140 = sphi 0, %s124
    $region4: #{tpu_custom_call.1} parent=1 // loop_header_branch
      %19 = sbr.rel (%p17) target = $region8
    $region5: #{tpu_custom_call.1} parent=1 // loop_body
      %s21 = ssub.s32 %s16, 1
      %s22 = ssub.s32 %s16, 2
      %s29 = sadd.s32 1, %s24
      %p30 = scmp.ge.s32.totalorder %s29, 1
      %s31 = scalar_select %p30, 0, %s29
      %s32 = sadd.s32 1, %s23
      %s33 = scalar_select %p30, %s32, %s23
      %p34 = scmp.ge.s32.totalorder %s33, 2
      %s35 = scalar_select %p34, 0, %s33
      %s36 = ssub.s32 %s23, %s35
      %s37 = ssub.s32 %s24, %s31
      %s38 = sor.u32 %s36, %s37
      %p39 = scmp.eq.s32.totalorder %s38, 0
      %s41 = sadd.s32 %s40, 1
      %s42 = scalar_select %p39, %s40, %s41
      %p45 = pneg %p39
      %p46 = scmp.eq.s32.totalorder %s16, 1
      %p47 = por %p45, %p46
      %p48 = scmp.ne.s32.totalorder %s40, %s43
      %p49 = scmp.eq.s32.totalorder %s16, 0
      %p50 = por %p48, %p49
      %p51 = scmp.ne.s32.totalorder %s40, %s43
      %p52 = scmp.eq.s32.totalorder %s21, 1
      %p53 = por %p51, %p52
      %p54 = scmp.ne.s32.totalorder %s43, %s44
      %p55 = scmp.eq.s32.totalorder %s21, 0
      %p56 = por %p54, %p55
      %p57 = scmp.ne.s32.totalorder %s43, %s44
      %p58 = scmp.eq.s32.totalorder %s22, 1
      %p59 = por %p57, %p58
      %p61 = scmp.ne.s32.totalorder %s44, %s60
      %p62 = scmp.eq.s32.totalorder %s22, 0
      %p63 = por %p61, %p62
      %s64 = ssub.s32 %s23, %s35
      %s65 = ssub.s32 %s24, %s31
      %s66 = sor.u32 %s64, %s65
      %p67 = scmp.eq.s32.totalorder %s66, 0
      %s69 = sadd.s32 %s68, 1
      %s70 = scalar_select %p67, %s68, %s69
      %p73 = pneg %p67
      %p74 = scmp.eq.s32.totalorder %s16, 1
      %p75 = por %p73, %p74
      %p76 = scmp.ne.s32.totalorder %s68, %s71
      %p77 = scmp.eq.s32.totalorder %s16, 0
      %p78 = por %p76, %p77
      %p79 = scmp.ne.s32.totalorder %s68, %s71
      %p80 = scmp.eq.s32.totalorder %s21, 1
      %p81 = por %p79, %p80
      %p82 = scmp.ne.s32.totalorder %s71, %s72
      %p83 = scmp.eq.s32.totalorder %s21, 0
      %p84 = por %p82, %p83
      %p85 = scmp.ne.s32.totalorder %s71, %s72
      %p86 = scmp.eq.s32.totalorder %s22, 1
      %p87 = por %p85, %p86
      %p89 = scmp.ne.s32.totalorder %s72, %s88
      %p90 = scmp.eq.s32.totalorder %s22, 0
      %p91 = por %p89, %p90
      %s92 = ssub.s32 %s23, %s35
      %p93 = scmp.eq.s32.totalorder %s92, 0
      %s95 = sadd.s32 %s94, 1
      %s96 = scalar_select %p93, %s94, %s95
      %p99 = pneg %p93
      %p100 = scmp.eq.s32.totalorder %s16, 1
      %p101 = por %p99, %p100
      %p102 = scmp.ne.s32.totalorder %s94, %s97
      %p103 = scmp.eq.s32.totalorder %s16, 0
      %p104 = por %p102, %p103
      %p105 = scmp.ne.s32.totalorder %s94, %s97
      %p106 = scmp.eq.s32.totalorder %s21, 1
      %p107 = por %p105, %p106
      %p108 = scmp.ne.s32.totalorder %s97, %s98
      %p109 = scmp.eq.s32.totalorder %s21, 0
      %p110 = por %p108, %p109
      %p111 = scmp.ne.s32.totalorder %s97, %s98
      %p112 = scmp.eq.s32.totalorder %s22, 1
      %p113 = por %p111, %p112
      %p115 = scmp.ne.s32.totalorder %s98, %s114
      %p116 = scmp.eq.s32.totalorder %s22, 0
      %p117 = por %p115, %p116
      %s118 = ssub.s32 %s23, %s35
      %p119 = scmp.eq.s32.totalorder %s118, 0
      %s121 = sadd.s32 %s120, 1
      %s122 = scalar_select %p119, %s120, %s121
      %p125 = pneg %p119
      %p126 = scmp.eq.s32.totalorder %s16, 1
      %p127 = por %p125, %p126
      %p128 = scmp.ne.s32.totalorder %s120, %s123
      %p129 = scmp.eq.s32.totalorder %s16, 0
      %p130 = por %p128, %p129
      %p131 = scmp.ne.s32.totalorder %s120, %s123
      %p132 = scmp.eq.s32.totalorder %s21, 1
      %p133 = por %p131, %p132
      %p134 = scmp.ne.s32.totalorder %s123, %s124
      %p135 = scmp.eq.s32.totalorder %s21, 0
      %p136 = por %p134, %p135
      %p137 = scmp.ne.s32.totalorder %s123, %s124
      %p138 = scmp.eq.s32.totalorder %s22, 1
      %p139 = por %p137, %p138
      %p141 = scmp.ne.s32.totalorder %s124, %s140
      %p142 = scmp.eq.s32.totalorder %s22, 0
      %p143 = por %p141, %p142
      %p144 = scmp.le.s32.totalorder 1, %s16
      %p145 = scmp.lt.s32.totalorder %s16, 3
      %p146 = pnand %p144, %p145
      %p147 = pneg %p146
      // Predicated region
      $region9: #{tpu_custom_call.1} parent=5 // pred_check
        _
      $region10: #{tpu_custom_call.1} parent=5 // pred_check_branch
        %149 = sbr.rel (%p146) target = $region12
      $region11: #{tpu_custom_call.1} parent=5 // pred_region
        %s150 = ssub.s32 %s16, 1
      $region12: #{tpu_custom_call.1} parent=5 // pred_fallthru
        _
      %p151 = scmp.lt.s32.totalorder %s16, 2
      // Predicated region
      $region13: #{tpu_custom_call.1} parent=5 // pred_check
        %p152 = pneg %p151
      $region14: #{tpu_custom_call.1} parent=5 // pred_check_branch
        %154 = sbr.rel (%p152) target = $region16
      $region15: #{tpu_custom_call.1} parent=5 // pred_region
        // Predicated region
        $region17: #{tpu_custom_call.1} parent=15 // pred_check
          %p155 = pneg %p50
        $region18: #{tpu_custom_call.1} parent=15 // pred_check_branch
          %157 = sbr.rel (%p155) target = $region20
        $region19: #{tpu_custom_call.1} parent=15 // pred_region
          %s158 = sand.u32 %s40, 1
          %s159 = scalar_lea.sflag [#allocation3], %s158
          %s160 = sand.u32 %s40, 1
          %s161 = smul.addr %s160, 8
          %s162 = scalar_lea.vmem [#allocation2], %s161
          %164 = vsyncadd %s159, 0
          %s165 = sadd.s32 %s24, %s23
          %s166 = smul.addr %s165, 8
          %s167 = scalar_lea.hbm %s0, %s166
          %s169 = sshll.u32 %s167, 4
          %s170 = int_to_ptr.hbm [resolvable:$true] %s169
          %s171 = sshll.u32 %s162, 4
          %s172 = int_to_ptr.vmem [resolvable:$true] %s171
          %174 = dma.hbm_to_vmem [thread:$0]  %s170, 128, %s172, %s159
        $region20: #{tpu_custom_call.1} parent=15 // pred_fallthru
          _
        // Predicated region
        $region21: #{tpu_custom_call.1} parent=15 // pred_check
          %p175 = pneg %p78
        $region22: #{tpu_custom_call.1} parent=15 // pred_check_branch
          %177 = sbr.rel (%p175) target = $region24
        $region23: #{tpu_custom_call.1} parent=15 // pred_region
          %s178 = sand.u32 %s68, 1
          %s179 = scalar_lea.sflag [#allocation5], %s178
          %s180 = sand.u32 %s68, 1
          %s181 = smul.addr %s180, 8
          %s182 = scalar_lea.vmem [#allocation4], %s181
          %184 = vsyncadd %s179, 0
          %s185 = sadd.s32 %s24, %s23
          %s186 = smul.addr %s185, 8
          %s187 = scalar_lea.hbm %s1, %s186
          %s189 = sshll.u32 %s187, 4
          %s190 = int_to_ptr.hbm [resolvable:$true] %s189
          %s191 = sshll.u32 %s182, 4
          %s192 = int_to_ptr.vmem [resolvable:$true] %s191
          %194 = dma.hbm_to_vmem [thread:$0]  %s190, 128, %s192, %s179
        $region24: #{tpu_custom_call.1} parent=15 // pred_fallthru
          _
      $region16: #{tpu_custom_call.1} parent=5 // pred_fallthru
        _
      %p195 = scmp.le.s32.totalorder 1, %s16
      %p196 = scmp.lt.s32.totalorder %s16, 3
      %p197 = pnand %p195, %p196
      %p198 = pneg %p197
      // Predicated region
      $region25: #{tpu_custom_call.1} parent=5 // pred_check
        _
      $region26: #{tpu_custom_call.1} parent=5 // pred_check_branch
        %200 = sbr.rel (%p197) target = $region28
      $region27: #{tpu_custom_call.1} parent=5 // pred_region
        %s201 = ssub.s32 %s16, 1
        %s202 = sand.u32 %s43, 1
        %s203 = scalar_lea.sflag [#allocation3], %s202
        %s204 = sand.u32 %s43, 1
        %s205 = smul.addr %s204, 8
        %s206 = scalar_lea.vmem [#allocation2], %s205
        // Predicated region
        $region29: #{tpu_custom_call.1} parent=27 // pred_check
          %p207 = pneg %p56
        $region30: #{tpu_custom_call.1} parent=27 // pred_check_branch
          %209 = sbr.rel (%p207) target = $region32
        $region31: #{tpu_custom_call.1} parent=27 // pred_region
          %211 = dma.done %s203, 128
        $region32: #{tpu_custom_call.1} parent=27 // pred_fallthru
          _
        %s212 = sand.u32 %s71, 1
        %s213 = scalar_lea.sflag [#allocation5], %s212
        %s214 = sand.u32 %s71, 1
        %s215 = smul.addr %s214, 8
        %s216 = scalar_lea.vmem [#allocation4], %s215
        // Predicated region
        $region33: #{tpu_custom_call.1} parent=27 // pred_check
          %p217 = pneg %p84
        $region34: #{tpu_custom_call.1} parent=27 // pred_check_branch
          %219 = sbr.rel (%p217) target = $region36
        $region35: #{tpu_custom_call.1} parent=27 // pred_region
          %221 = dma.done %s213, 128
        $region36: #{tpu_custom_call.1} parent=27 // pred_fallthru
          _
        %s222 = sand.u32 %s43, 1
        %s223 = scalar_lea.sflag [#allocation3], %s222
        %s224 = sand.u32 %s43, 1
        %s225 = smul.addr %s224, 8
        %s226 = scalar_lea.vmem [#allocation2], %s225
        %p227 = pneg %p56
        %p228 = pneg %p53
        %s229 = sand.u32 %s71, 1
        %s230 = scalar_lea.sflag [#allocation5], %s229
        %s231 = sand.u32 %s71, 1
        %s232 = smul.addr %s231, 8
        %s233 = scalar_lea.vmem [#allocation4], %s232
        %p234 = pneg %p84
        %p235 = pneg %p81
        %p236 = pneg %p110
        %p237 = pneg %p107
        %p238 = scmp.lt.s32.totalorder %s25, 1
        %s239 = scalar_select %p238, %s25, 1
        %s240 = smul.addr %s239, 8
        %s241 = scalar_lea.vmem %s2, %s240
        %p242 = pneg %p136
        %p243 = pneg %p133
        %p244 = scmp.lt.s32.totalorder %s25, 1
        %s245 = scalar_select %p244, %s25, 1
        %s246 = smul.addr %s245, 8
        %s247 = scalar_lea.vmem %s3, %s246
        %p248 = scmp.lt.s32.totalorder %s25, 1
        %s249 = scalar_select %p248, %s25, 1
        %s250 = smul.addr %s249, 8
        %s251 = scalar_lea.vmem %s2, %s250
        %p252 = scmp.lt.s32.totalorder %s25, 1
        %s253 = scalar_select %p252, %s25, 1
        %s254 = smul.addr %s253, 8
        %s255 = scalar_lea.vmem %s3, %s254
        %p256 = scmp.eq.s32.totalorder %s26, 0
        // Predicated region
        $region37: #{tpu_custom_call.1} parent=27 // pred_check
          %p257 = pneg %p256
        $region38: #{tpu_custom_call.1} parent=27 // pred_check_branch
          %259 = sbr.rel (%p257) target = $region40
        $region39: #{tpu_custom_call.1} parent=27 // pred_region
          %vm260 = vcmask 7168
          %261 = vst.msk [vmem:[%s251] sm:$0xff] %vm260, 0.0
          %262 = vst.msk [vmem:[%s255] sm:$0xff] %vm260, 0.0
        $region40: #{tpu_custom_call.1} parent=27 // pred_fallthru
          _
        %v263 = vld [vmem:[%s206] sm:$0xff]
        %v264 = vld [vmem:[%s216] sm:$0xff]
        %v265 = vsub.f32 0.0, %v263
        %v266 = vmul.f32 %v265, 1.442695
        %v267 = vpow.pop %v266
        %v268 = vadd.f32 %v267, 1.0
        %v269 = vrcp.pop %v268
        %v270 = vmul.f32 %v268, %v269
        %v271 = vsub.f32 1.0, %v270
        %v272 = vmul.f32 %v269, %v271
        %v273 = vadd.f32 %v269, %v272
        %vm274 = vweird.f32 %v268
        %vm275 = vweird.f32 %v269
        %vm276 = vmor %vm274, %vm275
        %v277 = vsel %vm276, %v269, %v273
        %v278 = vand.u32 2147483647, %v268
        %vm279 = vcmp.eq.f32.partialorder %v278, 8.507059e+37
        %v280 = vand.u32 %v268, 2147483648
        %v281 = vor.u32 1.1754944e-38, %v280
        %v282 = vsel %vm279, %v281, %v277
        %v283 = vld [vmem:[%s251] sm:$0xff]
        %v284 = vmul.f32 %v282, %v264
        %285 = vadd.xlane.f32.xlu0 %v284
        %v286 = vpop.xlane.xlu0 %285
        %v287 = vadd.f32 %v283, %v286
        %vm288 = vcmask 7168
        %289 = vst.msk [vmem:[%s251] sm:$0xff] %vm288, %v287
        %v290 = vld [vmem:[%s255] sm:$0xff]
        %v291 = vadd.f32 %v282, %v264
        %292 = vadd.xlane.f32.xlu0 %v291
        %v293 = vpop.xlane.xlu0 %292
        %v294 = vadd.f32 %v290, %v293
        %295 = vst.msk [vmem:[%s255] sm:$0xff] %vm288, %v294
        %p296 = scmp.lt.s32.totalorder %s25, 1
        %s297 = scalar_select %p296, %s25, 1
        %s298 = smul.addr %s297, 8
        %s299 = scalar_lea.vmem %s2, %s298
        %p300 = scmp.lt.s32.totalorder %s25, 1
        %s301 = scalar_select %p300, %s25, 1
        %s302 = smul.addr %s301, 8
        %s303 = scalar_lea.vmem %s3, %s302
        // Predicated region
        $region41: #{tpu_custom_call.1} parent=27 // pred_check
          %p304 = pneg %p107
        $region42: #{tpu_custom_call.1} parent=27 // pred_check_branch
          %306 = sbr.rel (%p304) target = $region44
        $region43: #{tpu_custom_call.1} parent=27 // pred_region
          _
        $region44: #{tpu_custom_call.1} parent=27 // pred_fallthru
          _
        // Predicated region
        $region45: #{tpu_custom_call.1} parent=27 // pred_check
          %p307 = pneg %p133
        $region46: #{tpu_custom_call.1} parent=27 // pred_check_branch
          %309 = sbr.rel (%p307) target = $region48
        $region47: #{tpu_custom_call.1} parent=27 // pred_region
          _
        $region48: #{tpu_custom_call.1} parent=27 // pred_fallthru
          _
      $region28: #{tpu_custom_call.1} parent=5 // pred_fallthru
        _
      %p310 = scmp.le.s32.totalorder 2, %s16
      // Predicated region
      $region49: #{tpu_custom_call.1} parent=5 // pred_check
        %p311 = pneg %p310
      $region50: #{tpu_custom_call.1} parent=5 // pred_check_branch
        %313 = sbr.rel (%p311) target = $region52
      $region51: #{tpu_custom_call.1} parent=5 // pred_region
        %s314 = ssub.s32 %s16, 2
        // Predicated region
        $region53: #{tpu_custom_call.1} parent=51 // pred_check
          %p315 = pneg %p113
        $region54: #{tpu_custom_call.1} parent=51 // pred_check_branch
          %317 = sbr.rel (%p315) target = $region56
        $region55: #{tpu_custom_call.1} parent=51 // pred_region
          %p318 = scmp.lt.s32.totalorder %s27, 1
          %s319 = scalar_select %p318, %s27, 1
          %s320 = smul.addr %s319, 8
          %s321 = scalar_lea.vmem %s2, %s320
        $region56: #{tpu_custom_call.1} parent=51 // pred_fallthru
          _
        // Predicated region
        $region57: #{tpu_custom_call.1} parent=51 // pred_check
          %p322 = pneg %p139
        $region58: #{tpu_custom_call.1} parent=51 // pred_check_branch
          %324 = sbr.rel (%p322) target = $region60
        $region59: #{tpu_custom_call.1} parent=51 // pred_region
          %p325 = scmp.lt.s32.totalorder %s27, 1
          %s326 = scalar_select %p325, %s27, 1
          %s327 = smul.addr %s326, 8
          %s328 = scalar_lea.vmem %s3, %s327
        $region60: #{tpu_custom_call.1} parent=51 // pred_fallthru
          _
      $region52: #{tpu_custom_call.1} parent=5 // pred_fallthru
        _
    $region6: #{tpu_custom_call.1} parent=1 // loop_footer
      %s20 = sadd.s32 1, %s16
    $region7: #{tpu_custom_call.1} parent=1 // loop_footer_branch
      %15 = sbr.rel target = $region3
    $region8: #{tpu_custom_call.1} parent=1 // loop_exit
      _
    %329 = vsyncpa [#allocation3], 1
    %s330 = scalar_lea.sflag [#allocation3], 1
    %331 = vsyncpa %s330, 1
    %332 = vsyncpa [#allocation5], 1
    %s333 = scalar_lea.sflag [#allocation5], 1
    %334 = vsyncpa %s333, 1

</llo_original>
